<compile_context>
chip_gen: v5e
topology: v5e:2x2
jax: 0.10.0
libtpu: 0.0.40
codegen_flags: <defaults>
</compile_context>

<pallas_src>
import numpy as np
import jax
import jax.numpy as jnp
from jax.experimental import pallas as pl
from jax.experimental.pallas import tpu as pltpu


def autopad(k, p=None):
    # Mirrors the YOLO-style autopad used by the module: default pad = k // 2.
    if p is None:
        p = k // 2 if isinstance(k, int) else tuple(v // 2 for v in k)
    if isinstance(p, int):
        p = (p, p)
    return p


def _largest_divisor_at_most(n, cap):
    cap = max(1, min(n, cap))
    for d in range(cap, 0, -1):
        if n % d == 0:
            return d
    return 1


def _maxpool2x2_kernel(x_ref, sl_ref, sr_ref, o_ref):
    # x_ref : (c_t, h2, 2*w)  -- original rows packed in pairs along lanes: [row 2i | row 2i+1]
    # sl_ref: (wout, w)       -- one-hot left-tap  selection (col = max(2*ow-1, 0))
    # sr_ref: (wout, w)       -- one-hot right-tap selection (col = min(2*ow,  w-1))
    # o_ref : (c_t, hout, wout) with hout = h2 + 1
    c_t, h2, w2 = x_ref.shape
    w = w2 // 2
    wout = o_ref.shape[2]

    x2 = x_ref[...]                       # one dense block load
    even_rows = x2[:, :, :w]              # original rows 0, 2, ..., h-2
    odd_rows = x2[:, :, w:]               # original rows 1, 3, ..., h-1

    # Broadcast the selection matrices once (batched-matmul rhs), hoisted out of pool_w.
    sl = jnp.broadcast_to(sl_ref[...][None, :, :], (c_t, wout, w))
    sr = jnp.broadcast_to(sr_ref[...][None, :, :], (c_t, wout, w))

    def pool_w(rows):
        # rows: (c_t, r, w), already reduced over the two H taps.
        # out[..., ow] = max(rows[..., max(2*ow-1, 0)], rows[..., min(2*ow, w-1)])
        left = jnp.einsum('crw,cow->cro', rows, sl,
                          preferred_element_type=jnp.float32)
        right = jnp.einsum('crw,cow->cro', rows, sr,
                           preferred_element_type=jnp.float32)
        return jnp.maximum(left, right).astype(o_ref.dtype)

    # H-direction windows are rows (2*oh - 1, 2*oh) with one implicit pad row at each end.
    o_ref[:, 0:1, :] = pool_w(even_rows[:, 0:1, :])              # oh = 0   -> only row 0
    if h2 > 1:                                                   # oh = 1 .. h2-1
        o_ref[:, 1:h2, :] = pool_w(
            jnp.maximum(odd_rows[:, :h2 - 1, :], even_rows[:, 1:, :]))
    o_ref[:, h2:h2 + 1, :] = pool_w(odd_rows[:, h2 - 1:h2, :])   # oh = h2  -> only row h-1


def max_pooling(x, kernel_size=(2, 2), padding=None):
    """nn.MaxPool2d(kernel_size=(2,2), stride=(2,2), padding=autopad) on NCHW input."""
    kh, kw = kernel_size
    assert (kh, kw) == (2, 2), "kernel specialized for 2x2 / stride-2 pooling"
    ph, pw = autopad(kernel_size, padding)
    assert (ph, pw) == (1, 1), "kernel specialized for padding=1 (autopad of k=2)"
    assert jnp.issubdtype(x.dtype, jnp.floating), "floating dtypes only"
    # TODO(synk): integer / fp8 inputs would need dtype-min handling and a non-MXU tap select.

    n, c, h, w = x.shape
    hout = (h + 2 * ph - kh) // kh + 1      # = h // 2 + 1
    wout = (w + 2 * pw - kw) // kw + 1      # = w // 2 + 1

    # Odd H: append one dtype-min row so rows pack in pairs; the extra output row is
    # sliced off below.  No-op for the usual even-H case (the test uses H = 16).
    if h % 2:
        x = jnp.pad(x, ((0, 0), (0, 0), (0, 1), (0, 0)),
                    constant_values=jnp.finfo(x.dtype).min)
    h_eff = x.shape[2]
    h2 = h_eff // 2
    hout_k = h2 + 1                          # kernel's output rows (== hout when H even)

    # FREE reshape (row-major, no HBM pass): pack row pairs side by side along lanes.
    xr = x.reshape(n, c, h2, 2 * w)

    # One-hot W-tap selection matrices (clamped indices stand in for the -inf padding).
    ow_idx = np.arange(wout)
    cols = np.arange(w)
    left_src = np.maximum(2 * ow_idx - 1, 0)
    right_src = np.minimum(2 * ow_idx, w - 1)
    sel_l = jnp.asarray(cols[None, :] == left_src[:, None], dtype=x.dtype)   # (wout, w)
    sel_r = jnp.asarray(cols[None, :] == right_src[:, None], dtype=x.dtype)  # (wout, w)

    # Channel tiling: ~2 MiB of (lane-padded) input per grid step; Pallas double-buffers.
    itemsize = jnp.dtype(x.dtype).itemsize
    lane_padded_row = ((2 * w + 127) // 128) * 128
    per_channel_bytes = max(1, h2 * lane_padded_row * itemsize)
    c_t = _largest_divisor_at_most(c, (2 << 20) // per_channel_bytes)

    grid = (n, c // c_t)
    out = pl.pallas_call(
        _maxpool2x2_kernel,
        out_shape=jax.ShapeDtypeStruct((n, c, hout_k, wout), x.dtype),
        grid=grid,
        in_specs=[
            pl.BlockSpec((None, c_t, h2, 2 * w), lambda ni, ci: (ni, ci, 0, 0)),
            pl.BlockSpec((wout, w), lambda ni, ci: (0, 0)),
            pl.BlockSpec((wout, w), lambda ni, ci: (0, 0)),
        ],
        out_specs=pl.BlockSpec((None, c_t, hout_k, wout),
                               lambda ni, ci: (ni, ci, 0, 0)),
        compiler_params=pltpu.CompilerParams(
            dimension_semantics=("parallel", "parallel"),
            vmem_limit_bytes=32 * 1024 * 1024,
        ),
        cost_estimate=pl.CostEstimate(
            flops=3 * n * c * hout_k * wout,
            transcendentals=0,
            bytes_accessed=(n * c * h_eff * w + n * c * hout_k * wout) * itemsize,
        ),
    )(xr, sel_l, sel_r)

    if hout_k != hout:
        out = out[:, :, :hout, :]
    return out


if __name__ == "__main__":
    key = jax.random.PRNGKey(0)
    x = jax.random.normal(key, (2, 4, 16, 16), dtype=jnp.float32)

    out = max_pooling(x, kernel_size=(2, 2), padding=None)
    out = jax.block_until_ready(out)
    assert out.shape == (2, 4, 9, 9), out.shape

    # Reference: same pooling via lax.reduce_window (implicit -inf padding).
    ref = jax.lax.reduce_window(
        x,
        -jnp.inf,
        jax.lax.max,
        window_dimensions=(1, 1, 2, 2),
        window_strides=(1, 1, 2, 2),
        padding=((0, 0), (0, 0), (1, 1), (1, 1)),
    )
    assert jnp.allclose(out, ref), "mismatch vs reduce_window reference"

    print("KERNEL_OK")
</pallas_src>

<mosaic_0001>
module attributes {stable_mosaic.version = 11 : i64} {
  func.func @_maxpool2x2_kernel(%arg0: i32, %arg1: i32, %arg2: memref<1x4x8x32xf32, #tpu.memory_space<vmem>>, %arg3: memref<9x16xf32, #tpu.memory_space<vmem>>, %arg4: memref<9x16xf32, #tpu.memory_space<vmem>>, %arg5: memref<1x4x9x9xf32, #tpu.memory_space<vmem>>) attributes {dimension_semantics = [#tpu.dimension_semantics<parallel>, #tpu.dimension_semantics<parallel>], iteration_bounds = array<i64: 2, 1>, scalar_prefetch = 0 : i64, scratch_operands = 0 : i64, tpu.core_type = #tpu.core_type<tc>, window_params = [{transform_indices = @transform_0, window_bounds = array<i64: 1, 4, 8, 32>}, {pipeline_mode = #tpu.pipeline_mode<synchronous>, transform_indices = @transform_1, window_bounds = array<i64: 9, 16>}, {pipeline_mode = #tpu.pipeline_mode<synchronous>, transform_indices = @transform_2, window_bounds = array<i64: 9, 16>}, {transform_indices = @transform_3, window_bounds = array<i64: 1, 4, 9, 9>}]} {
    %c0 = arith.constant 0 : index
    %c0_0 = arith.constant 0 : index
    %c0_1 = arith.constant 0 : index
    %c0_2 = arith.constant 0 : index
    %0 = vector.load %arg2[%c0, %c0_0, %c0_1, %c0_2] : memref<1x4x8x32xf32, #tpu.memory_space<vmem>>, vector<1x4x8x32xf32>
    %1 = vector.shape_cast %0 : vector<1x4x8x32xf32> to vector<4x8x32xf32>
    %2 = vector.extract_strided_slice %1 {offsets = [0, 0, 0], sizes = [4, 8, 16], strides = [1, 1, 1]} : vector<4x8x32xf32> to vector<4x8x16xf32>
    %3 = vector.extract_strided_slice %1 {offsets = [0, 0, 16], sizes = [4, 8, 16], strides = [1, 1, 1]} : vector<4x8x32xf32> to vector<4x8x16xf32>
    %c0_3 = arith.constant 0 : index
    %c0_4 = arith.constant 0 : index
    %4 = vector.load %arg3[%c0_3, %c0_4] : memref<9x16xf32, #tpu.memory_space<vmem>>, vector<9x16xf32>
    %5 = vector.shape_cast %4 : vector<9x16xf32> to vector<1x9x16xf32>
    %6 = vector.shape_cast %5 : vector<1x9x16xf32> to vector<1x9x16xf32>
    %7 = vector.broadcast %6 : vector<1x9x16xf32> to vector<4x9x16xf32>
    %c0_5 = arith.constant 0 : index
    %c0_6 = arith.constant 0 : index
    %8 = vector.load %arg4[%c0_5, %c0_6] : memref<9x16xf32, #tpu.memory_space<vmem>>, vector<9x16xf32>
    %9 = vector.shape_cast %8 : vector<9x16xf32> to vector<1x9x16xf32>
    %10 = vector.shape_cast %9 : vector<1x9x16xf32> to vector<1x9x16xf32>
    %11 = vector.broadcast %10 : vector<1x9x16xf32> to vector<4x9x16xf32>
    %12 = vector.extract_strided_slice %2 {offsets = [0, 0, 0], sizes = [4, 1, 16], strides = [1, 1, 1]} : vector<4x8x16xf32> to vector<4x1x16xf32>
    "tpu.trace_start"() <{level = 10 : i32, message = "crw,cow->cro"}> : () -> ()
    %cst = arith.constant dense<0.000000e+00> : vector<4x1x9xf32>
    %13 = tpu.matmul %12, %7, %cst {dimension_numbers = #tpu.dot_dimension_numbers<[2], [2], [1], [1], [0, 0, 0, 1, 1, 1], [0], [0]>} : vector<4x1x16xf32>, vector<4x9x16xf32>, vector<4x1x9xf32> -> vector<4x1x9xf32>
    %cst_7 = arith.constant dense<0.000000e+00> : vector<4x1x9xf32>
    %14 = tpu.matmul %12, %11, %cst_7 {dimension_numbers = #tpu.dot_dimension_numbers<[2], [2], [1], [1], [0, 0, 0, 1, 1, 1], [0], [0]>} : vector<4x1x16xf32>, vector<4x9x16xf32>, vector<4x1x9xf32> -> vector<4x1x9xf32>
    "tpu.trace_stop"() : () -> ()
    %15 = arith.maximumf %13, %14 : vector<4x1x9xf32>
    %c0_8 = arith.constant 0 : index
    %c0_9 = arith.constant 0 : index
    %c0_10 = arith.constant 0 : index
    %c0_11 = arith.constant 0 : index
    %16 = vector.load %arg5[%c0_8, %c0_9, %c0_10, %c0_11] : memref<1x4x9x9xf32, #tpu.memory_space<vmem>>, vector<1x4x1x9xf32>
    %17 = vector.shape_cast %16 : vector<1x4x1x9xf32> to vector<4x1x9xf32>
    %18 = vector.shape_cast %15 : vector<4x1x9xf32> to vector<1x4x1x9xf32>
    tpu.vector_store %arg5[%c0_8, %c0_9, %c0_10, %c0_11], %18 {strides = array<i32>} : memref<1x4x9x9xf32, #tpu.memory_space<vmem>>, vector<1x4x1x9xf32>,
    %19 = vector.extract_strided_slice %3 {offsets = [0, 0, 0], sizes = [4, 7, 16], strides = [1, 1, 1]} : vector<4x8x16xf32> to vector<4x7x16xf32>
    %20 = vector.extract_strided_slice %2 {offsets = [0, 1, 0], sizes = [4, 7, 16], strides = [1, 1, 1]} : vector<4x8x16xf32> to vector<4x7x16xf32>
    %21 = arith.maximumf %19, %20 : vector<4x7x16xf32>
    "tpu.trace_start"() <{level = 10 : i32, message = "crw,cow->cro"}> : () -> ()
    %cst_12 = arith.constant dense<0.000000e+00> : vector<4x7x9xf32>
    %22 = tpu.matmul %21, %7, %cst_12 {dimension_numbers = #tpu.dot_dimension_numbers<[2], [2], [1], [1], [0, 0, 0, 1, 1, 1], [0], [0]>} : vector<4x7x16xf32>, vector<4x9x16xf32>, vector<4x7x9xf32> -> vector<4x7x9xf32>
    %cst_13 = arith.constant dense<0.000000e+00> : vector<4x7x9xf32>
    %23 = tpu.matmul %21, %11, %cst_13 {dimension_numbers = #tpu.dot_dimension_numbers<[2], [2], [1], [1], [0, 0, 0, 1, 1, 1], [0], [0]>} : vector<4x7x16xf32>, vector<4x9x16xf32>, vector<4x7x9xf32> -> vector<4x7x9xf32>
    "tpu.trace_stop"() : () -> ()
    %24 = arith.maximumf %22, %23 : vector<4x7x9xf32>
    %c0_14 = arith.constant 0 : index
    %c0_15 = arith.constant 0 : index
    %c1 = arith.constant 1 : index
    %c0_16 = arith.constant 0 : index
    %25 = vector.load %arg5[%c0_14, %c0_15, %c1, %c0_16] : memref<1x4x9x9xf32, #tpu.memory_space<vmem>>, vector<1x4x7x9xf32>
    %26 = vector.shape_cast %25 : vector<1x4x7x9xf32> to vector<4x7x9xf32>
    %27 = vector.shape_cast %24 : vector<4x7x9xf32> to vector<1x4x7x9xf32>
    tpu.vector_store %arg5[%c0_14, %c0_15, %c1, %c0_16], %27 {strides = array<i32>} : memref<1x4x9x9xf32, #tpu.memory_space<vmem>>, vector<1x4x7x9xf32>,
    %28 = vector.extract_strided_slice %3 {offsets = [0, 7, 0], sizes = [4, 1, 16], strides = [1, 1, 1]} : vector<4x8x16xf32> to vector<4x1x16xf32>
    "tpu.trace_start"() <{level = 10 : i32, message = "crw,cow->cro"}> : () -> ()
    %cst_17 = arith.constant dense<0.000000e+00> : vector<4x1x9xf32>
    %29 = tpu.matmul %28, %7, %cst_17 {dimension_numbers = #tpu.dot_dimension_numbers<[2], [2], [1], [1], [0, 0, 0, 1, 1, 1], [0], [0]>} : vector<4x1x16xf32>, vector<4x9x16xf32>, vector<4x1x9xf32> -> vector<4x1x9xf32>
    %cst_18 = arith.constant dense<0.000000e+00> : vector<4x1x9xf32>
    %30 = tpu.matmul %28, %11, %cst_18 {dimension_numbers = #tpu.dot_dimension_numbers<[2], [2], [1], [1], [0, 0, 0, 1, 1, 1], [0], [0]>} : vector<4x1x16xf32>, vector<4x9x16xf32>, vector<4x1x9xf32> -> vector<4x1x9xf32>
    "tpu.trace_stop"() : () -> ()
    %31 = arith.maximumf %29, %30 : vector<4x1x9xf32>
    %c0_19 = arith.constant 0 : index
    %c0_20 = arith.constant 0 : index
    %c8 = arith.constant 8 : index
    %c0_21 = arith.constant 0 : index
    %32 = vector.load %arg5[%c0_19, %c0_20, %c8, %c0_21] : memref<1x4x9x9xf32, #tpu.memory_space<vmem>>, vector<1x4x1x9xf32>
    %33 = vector.shape_cast %32 : vector<1x4x1x9xf32> to vector<4x1x9xf32>
    %34 = vector.shape_cast %31 : vector<4x1x9xf32> to vector<1x4x1x9xf32>
    tpu.vector_store %arg5[%c0_19, %c0_20, %c8, %c0_21], %34 {strides = array<i32>} : memref<1x4x9x9xf32, #tpu.memory_space<vmem>>, vector<1x4x1x9xf32>,
    return
  }
  func.func @transform_0(%arg0: i32, %arg1: i32) -> (i32, i32, i32, i32) {
    %c0_i32 = arith.constant 0 : i32
    %c0_i32_0 = arith.constant 0 : i32
    %c0_i32_1 = arith.constant 0 : i32
    return %arg0, %arg1, %c0_i32, %c0_i32_0 : i32, i32, i32, i32
  }
  func.func @transform_1(%arg0: i32, %arg1: i32) -> (i32, i32) {
    %c0_i32 = arith.constant 0 : i32
    %c0_i32_0 = arith.constant 0 : i32
    %c0_i32_1 = arith.constant 0 : i32
    return %c0_i32, %c0_i32_0 : i32, i32
  }
  func.func @transform_2(%arg0: i32, %arg1: i32) -> (i32, i32) {
    %c0_i32 = arith.constant 0 : i32
    %c0_i32_0 = arith.constant 0 : i32
    %c0_i32_1 = arith.constant 0 : i32
    return %c0_i32, %c0_i32_0 : i32, i32
  }
  func.func @transform_3(%arg0: i32, %arg1: i32) -> (i32, i32, i32, i32) {
    %c0_i32 = arith.constant 0 : i32
    %c0_i32_0 = arith.constant 0 : i32
    %c0_i32_1 = arith.constant 0 : i32
    return %arg0, %arg1, %c0_i32, %c0_i32_0 : i32, i32, i32, i32
  }
}

</mosaic_0001>

<llo_original>
// kernel: tpu_custom_call.1
$region0: #{tpu_custom_call.1}
  #allocation0 [shape = 'u32[]', space=smem, size = 0x4, offset = 0x4, fixed_abs, tag = 'smem constant byte address 0x4 - core index']
  #allocation1 [shape = 'u32[72,128]{1,0:T(1,128)}', space=vmem, size = 0x9000, scoped, tag = 'internal scratch']
  %s0 = inlined_call_operand.hbm [shape: f32[2,4,8,32], index: 0, kind: input, shape index: {}]
  %s1 = inlined_call_operand.hbm [shape: f32[9,16], index: 1, kind: input, shape index: {}]
  %s2 = inlined_call_operand.hbm [shape: f32[9,16], index: 2, kind: input, shape index: {}]
  %s3 = inlined_call_operand.vmem [shape: f32[2,4,9,9], index: 3, kind: output, shape index: {}]
  %s4 = sld [smem:[#allocation0]]
  $region57: #{tpu_custom_call.1} parent=0
    _
  %s6 = ssub.s32 1, %s4
  %s7 = scalar_select 0, %s6, %s4
  $region1: #{tpu_custom_call.1} parent=0
    #allocation2 [shape = 'u8[32768]{0}', space=vmem, size = 0x8000, scoped, tag = 'input window, operand 0']
    #allocation3 [shape = 's32[2]{0}', space=sflag, size = 0x8, scoped, tag = 'scoped memory for tpu_custom_call.1']
    #allocation4 [shape = 'u8[8192]{0}', space=vmem, size = 0x2000, scoped, tag = 'input window, operand 1, single buffered']
    #allocation5 [shape = 's32[1]{0}', space=sflag, size = 0x4, scoped, tag = 'scoped memory for tpu_custom_call.1']
    #allocation6 [shape = 'u8[8192]{0}', space=vmem, size = 0x2000, scoped, tag = 'input window, operand 2, single buffered']
    %8 = vsyncpa [#allocation3], 0
    %s9 = scalar_lea.sflag [#allocation3], 1
    %10 = vsyncpa %s9, 0
    %11 = vsyncpa [#allocation5], 0
    loop: start=0, step=1, limit=4
    $region2: #{tpu_custom_call.1} parent=1 // loop_pre_header
      _
    $region3: #{tpu_custom_call.1} parent=1 // loop_header
      %s13 = sphi 0, %s17
      %p14 = scmp.ge.s32.totalorder %s13, 4
      %s20 = sphi 0, %s32
      %s21 = sphi 0, %s28
      %s22 = sphi 0, %s20
      %s23 = sphi 0, %s21
      %s24 = sphi 0, %s22
      %s25 = sphi 0, %s23
      %s37 = sphi 0, %s39
      %s40 = sphi 0, %s37
      %s41 = sphi 0, %s40
      %s57 = sphi 0, %s41
      %s61 = sphi 0, %s61
      %s63 = sphi 0, %s61
      %s64 = sphi 0, %s63
      %s78 = sphi 0, %s64
      %s82 = sphi 0, %s82
      %s84 = sphi 0, %s82
      %s85 = sphi 0, %s84
      %s99 = sphi 0, %s85
      %s107 = sphi 0, %s109
      %s110 = sphi 0, %s107
      %s111 = sphi 0, %s110
      %s127 = sphi 0, %s111
    $region4: #{tpu_custom_call.1} parent=1 // loop_header_branch
      %16 = sbr.rel (%p14) target = $region8
    $region5: #{tpu_custom_call.1} parent=1 // loop_body
      %s18 = ssub.s32 %s13, 1
      %s19 = ssub.s32 %s13, 2
      %s26 = sadd.s32 1, %s21
      %p27 = scmp.ge.s32.totalorder %s26, 1
      %s28 = scalar_select %p27, 0, %s26
      %s29 = sadd.s32 1, %s20
      %s30 = scalar_select %p27, %s29, %s20
      %p31 = scmp.ge.s32.totalorder %s30, 2
      %s32 = scalar_select %p31, 0, %s30
      %s33 = ssub.s32 %s20, %s32
      %s34 = ssub.s32 %s21, %s28
      %s35 = sor.u32 %s33, %s34
      %p36 = scmp.eq.s32.totalorder %s35, 0
      %s38 = sadd.s32 %s37, 1
      %s39 = scalar_select %p36, %s37, %s38
      %p42 = pneg %p36
      %p43 = scmp.eq.s32.totalorder %s13, 1
      %p44 = por %p42, %p43
      %p45 = scmp.ne.s32.totalorder %s37, %s40
      %p46 = scmp.eq.s32.totalorder %s13, 0
      %p47 = por %p45, %p46
      %p48 = scmp.ne.s32.totalorder %s37, %s40
      %p49 = scmp.eq.s32.totalorder %s18, 1
      %p50 = por %p48, %p49
      %p51 = scmp.ne.s32.totalorder %s40, %s41
      %p52 = scmp.eq.s32.totalorder %s18, 0
      %p53 = por %p51, %p52
      %p54 = scmp.ne.s32.totalorder %s40, %s41
      %p55 = scmp.eq.s32.totalorder %s19, 1
      %p56 = por %p54, %p55
      %p58 = scmp.ne.s32.totalorder %s41, %s57
      %p59 = scmp.eq.s32.totalorder %s19, 0
      %p60 = por %p58, %p59
      %s62 = sadd.s32 %s61, 1
      %p65 = scmp.eq.s32.totalorder %s13, 1
      %p66 = scmp.ne.s32.totalorder %s61, %s63
      %p67 = scmp.eq.s32.totalorder %s13, 0
      %p68 = por %p66, %p67
      %p69 = scmp.ne.s32.totalorder %s61, %s63
      %p70 = scmp.eq.s32.totalorder %s18, 1
      %p71 = por %p69, %p70
      %p72 = scmp.ne.s32.totalorder %s63, %s64
      %p73 = scmp.eq.s32.totalorder %s18, 0
      %p74 = por %p72, %p73
      %p75 = scmp.ne.s32.totalorder %s63, %s64
      %p76 = scmp.eq.s32.totalorder %s19, 1
      %p77 = por %p75, %p76
      %p79 = scmp.ne.s32.totalorder %s64, %s78
      %p80 = scmp.eq.s32.totalorder %s19, 0
      %p81 = por %p79, %p80
      %s83 = sadd.s32 %s82, 1
      %p86 = scmp.eq.s32.totalorder %s13, 1
      %p87 = scmp.ne.s32.totalorder %s82, %s84
      %p88 = scmp.eq.s32.totalorder %s13, 0
      %p89 = por %p87, %p88
      %p90 = scmp.ne.s32.totalorder %s82, %s84
      %p91 = scmp.eq.s32.totalorder %s18, 1
      %p92 = por %p90, %p91
      %p93 = scmp.ne.s32.totalorder %s84, %s85
      %p94 = scmp.eq.s32.totalorder %s18, 0
      %p95 = por %p93, %p94
      %p96 = scmp.ne.s32.totalorder %s84, %s85
      %p97 = scmp.eq.s32.totalorder %s19, 1
      %p98 = por %p96, %p97
      %p100 = scmp.ne.s32.totalorder %s85, %s99
      %p101 = scmp.eq.s32.totalorder %s19, 0
      %p102 = por %p100, %p101
      %s103 = ssub.s32 %s20, %s32
      %s104 = ssub.s32 %s21, %s28
      %s105 = sor.u32 %s103, %s104
      %p106 = scmp.eq.s32.totalorder %s105, 0
      %s108 = sadd.s32 %s107, 1
      %s109 = scalar_select %p106, %s107, %s108
      %p112 = pneg %p106
      %p113 = scmp.eq.s32.totalorder %s13, 1
      %p114 = por %p112, %p113
      %p115 = scmp.ne.s32.totalorder %s107, %s110
      %p116 = scmp.eq.s32.totalorder %s13, 0
      %p117 = por %p115, %p116
      %p118 = scmp.ne.s32.totalorder %s107, %s110
      %p119 = scmp.eq.s32.totalorder %s18, 1
      %p120 = por %p118, %p119
      %p121 = scmp.ne.s32.totalorder %s110, %s111
      %p122 = scmp.eq.s32.totalorder %s18, 0
      %p123 = por %p121, %p122
      %p124 = scmp.ne.s32.totalorder %s110, %s111
      %p125 = scmp.eq.s32.totalorder %s19, 1
      %p126 = por %p124, %p125
      %p128 = scmp.ne.s32.totalorder %s111, %s127
      %p129 = scmp.eq.s32.totalorder %s19, 0
      %p130 = por %p128, %p129
      %p131 = scmp.le.s32.totalorder 1, %s13
      %p132 = scmp.lt.s32.totalorder %s13, 3
      %p133 = pnand %p131, %p132
      %p134 = pneg %p133
      // Predicated region
      $region9: #{tpu_custom_call.1} parent=5 // pred_check
        _
      $region10: #{tpu_custom_call.1} parent=5 // pred_check_branch
        %136 = sbr.rel (%p133) target = $region12
      $region11: #{tpu_custom_call.1} parent=5 // pred_region
        %s137 = ssub.s32 %s13, 1
        // Predicated region
        $region13: #{tpu_custom_call.1} parent=11 // pred_check
          %p138 = pneg %p74
        $region14: #{tpu_custom_call.1} parent=11 // pred_check_branch
          %140 = sbr.rel (%p138) target = $region16
        $region15: #{tpu_custom_call.1} parent=11 // pred_region
          %142 = vsyncadd [#allocation5], 0
          %s143 = sshll.u32 %s1, 4
          %s144 = int_to_ptr.hbm [resolvable:$true] %s143
          %s145 = sshll.u32 [#allocation4], 4
          %s146 = int_to_ptr.vmem [resolvable:$true] %s145
          %151 = dma.hbm_to_vmem [thread:$0]  %s144, 256, %s146, [#allocation5], 128, 128, 8
        $region16: #{tpu_custom_call.1} parent=11 // pred_fallthru
          _
        // Predicated region
        $region17: #{tpu_custom_call.1} parent=11 // pred_check
          %p152 = pneg %p95
        $region18: #{tpu_custom_call.1} parent=11 // pred_check_branch
          %154 = sbr.rel (%p152) target = $region20
        $region19: #{tpu_custom_call.1} parent=11 // pred_region
          %156 = vsyncadd [#allocation5], 0
          %s157 = sshll.u32 %s2, 4
          %s158 = int_to_ptr.hbm [resolvable:$true] %s157
          %s159 = sshll.u32 [#allocation6], 4
          %s160 = int_to_ptr.vmem [resolvable:$true] %s159
          %165 = dma.hbm_to_vmem [thread:$0]  %s158, 256, %s160, [#allocation5], 128, 128, 8
        $region20: #{tpu_custom_call.1} parent=11 // pred_fallthru
          _
      $region12: #{tpu_custom_call.1} parent=5 // pred_fallthru
        _
      %p166 = scmp.lt.s32.totalorder %s13, 2
      // Predicated region
      $region21: #{tpu_custom_call.1} parent=5 // pred_check
        %p167 = pneg %p166
      $region22: #{tpu_custom_call.1} parent=5 // pred_check_branch
        %169 = sbr.rel (%p167) target = $region24
      $region23: #{tpu_custom_call.1} parent=5 // pred_region
        // Predicated region
        $region25: #{tpu_custom_call.1} parent=23 // pred_check
          %p170 = pneg %p47
        $region26: #{tpu_custom_call.1} parent=23 // pred_check_branch
          %172 = sbr.rel (%p170) target = $region28
        $region27: #{tpu_custom_call.1} parent=23 // pred_region
          %s173 = sand.u32 %s37, 1
          %s174 = scalar_lea.sflag [#allocation3], %s173
          %s175 = sand.u32 %s37, 1
          %s176 = smul.addr %s175, 32
          %s177 = scalar_lea.vmem [#allocation2], %s176
          %s178 = smul.u32 4, %s21
          %180 = vsyncadd %s174, 0
          %s181 = smul.addr %s20, 4
          %s182 = sadd.s32 %s178, %s181
          %s183 = smul.addr %s182, 8
          %s184 = scalar_lea.hbm %s0, %s183
          %s185 = sshll.u32 %s184, 4
          %s186 = int_to_ptr.hbm [resolvable:$true] %s185
          %s187 = sshll.u32 %s177, 4
          %s188 = int_to_ptr.vmem [resolvable:$true] %s187
          %193 = dma.hbm_to_vmem [thread:$0]  %s186, 512, %s188, %s174, 128, 128, 8
        $region28: #{tpu_custom_call.1} parent=23 // pred_fallthru
          _
      $region24: #{tpu_custom_call.1} parent=5 // pred_fallthru
        _
      %p194 = scmp.le.s32.totalorder 1, %s13
      %p195 = scmp.lt.s32.totalorder %s13, 3
      %p196 = pnand %p194, %p195
      %p197 = pneg %p196
      // Predicated region
      $region29: #{tpu_custom_call.1} parent=5 // pred_check
        _
      $region30: #{tpu_custom_call.1} parent=5 // pred_check_branch
        %199 = sbr.rel (%p196) target = $region32
      $region31: #{tpu_custom_call.1} parent=5 // pred_region
        %s200 = ssub.s32 %s13, 1
        %s201 = sand.u32 %s40, 1
        %s202 = scalar_lea.sflag [#allocation3], %s201
        %s203 = sand.u32 %s40, 1
        %s204 = smul.addr %s203, 32
        %s205 = scalar_lea.vmem [#allocation2], %s204
        // Predicated region
        $region33: #{tpu_custom_call.1} parent=31 // pred_check
          %p206 = pneg %p53
        $region34: #{tpu_custom_call.1} parent=31 // pred_check_branch
          %208 = sbr.rel (%p206) target = $region36
        $region35: #{tpu_custom_call.1} parent=31 // pred_region
          %210 = dma.done %s202, 512
        $region36: #{tpu_custom_call.1} parent=31 // pred_fallthru
          _
        // Predicated region
        $region37: #{tpu_custom_call.1} parent=31 // pred_check
          %p211 = pneg %p74
        $region38: #{tpu_custom_call.1} parent=31 // pred_check_branch
          %213 = sbr.rel (%p211) target = $region40
        $region39: #{tpu_custom_call.1} parent=31 // pred_region
          %215 = dma.done [#allocation5], 256
        $region40: #{tpu_custom_call.1} parent=31 // pred_fallthru
          _
        // Predicated region
        $region41: #{tpu_custom_call.1} parent=31 // pred_check
          %p216 = pneg %p95
        $region42: #{tpu_custom_call.1} parent=31 // pred_check_branch
          %218 = sbr.rel (%p216) target = $region44
        $region43: #{tpu_custom_call.1} parent=31 // pred_region
          %220 = dma.done [#allocation5], 256
        $region44: #{tpu_custom_call.1} parent=31 // pred_fallthru
          _
        %s221 = sand.u32 %s40, 1
        %s222 = scalar_lea.sflag [#allocation3], %s221
        %s223 = sand.u32 %s40, 1
        %s224 = smul.addr %s223, 32
        %s225 = scalar_lea.vmem [#allocation2], %s224
        %p226 = pneg %p53
        %p227 = pneg %p50
        %p228 = pneg %p74
        %p229 = pneg %p71
        %p230 = pneg %p95
        %p231 = pneg %p92
        %p232 = pneg %p123
        %p233 = pneg %p120
        %s234 = smul.u32 4, %s23
        %p235 = scmp.lt.s32.totalorder %s22, 1
        %s236 = scalar_select %p235, %s22, 1
        %p237 = scmp.lt.s32.totalorder %s234, 3
        %s238 = scalar_select %p237, %s234, 3
        %s239 = smul.addr %s238, 2
        %s240 = smul.addr %s236, 8
        %s241 = sadd.s32 %s239, %s240
        %s242 = smul.addr %s241, 8
        %s243 = scalar_lea.vmem %s3, %s242
        %s244 = smul.u32 4, %s23
        %s245 = smul.u32 4, %s23
        %p246 = scmp.lt.s32.totalorder %s22, 1
        %s247 = scalar_select %p246, %s22, 1
        %p248 = scmp.lt.s32.totalorder %s245, 3
        %s249 = scalar_select %p248, %s245, 3
        %s250 = smul.addr %s249, 2
        %s251 = smul.addr %s247, 8
        %s252 = sadd.s32 %s250, %s251
        %s253 = smul.addr %s252, 8
        %s254 = scalar_lea.vmem %s3, %s253
        %s255 = smul.u32 4, %s23
        %v256 = vld [vmem:[%s205] sm:$0xff]
        %v257 = vld [vmem:[%s205 + $0x8] sm:$0xff]
        %v258 = vld [vmem:[%s205 + $0x10] sm:$0xff]
        %v259 = vld [vmem:[%s205 + $0x18] sm:$0xff]
        %v260 = vld [vmem:[#allocation4] sm:$0xff]
        %v261 = vld [vmem:[#allocation4 + $0x8] sm:$0x1]
        %v262 = vld [vmem:[#allocation6] sm:$0xff]
        %v263 = vld [vmem:[#allocation6 + $0x8] sm:$0x1]
        %vm264 = vcmask 130048
        %v266 = vsel %vm264, %v256, 0
        %v269 = vsel %vm264, %v260, 0
        %v272 = vsel %vm264, %v261, 0
        %274 = vmatpush.xpose.msra.mxu0 0.0
        %275 = vmatpush.xpose.msra.mxu0 0.0
        %276 = vmatpush.xpose.msra.mxu0 0.0
        %277 = vmatpush.xpose.msra.mxu0 0.0
        %278 = vmatpush.xpose.msra.mxu0 0.0
        %279 = vmatpush.xpose.msra.mxu0 0.0
        %280 = vmatpush.xpose.msra.mxu0 0.0
        %281 = vmatpush.xpose.msra.mxu0 0.0
        %282 = vmatpush.xpose.msra.mxu0 0.0
        %283 = vmatpush.xpose.msra.mxu0 0.0
        %284 = vmatpush.xpose.msra.mxu0 0.0
        %285 = vmatpush.xpose.msra.mxu0 0.0
        %286 = vmatpush.xpose.msra.mxu0 0.0
        %287 = vmatpush.xpose.msra.mxu0 0.0
        %288 = vmatpush.xpose.msra.mxu0 %v272
        %289 = vmatpush.xpose.msra.mxu0 %v269
        %290 = vmatmul.f32.gmra.mxu0 %v266
        %v291 = vpop.f32.mrf.mxu0
        %v292 = vadd.f32 0.0, %v291
        %293 = vdwg.mxu0
        %v295 = vsel %vm264, %v257, 0
        %297 = vmatpush.xpose.msra.mxu0 0.0
        %298 = vmatpush.xpose.msra.mxu0 0.0
        %299 = vmatpush.xpose.msra.mxu0 0.0
        %300 = vmatpush.xpose.msra.mxu0 0.0
        %301 = vmatpush.xpose.msra.mxu0 0.0
        %302 = vmatpush.xpose.msra.mxu0 0.0
        %303 = vmatpush.xpose.msra.mxu0 0.0
        %304 = vmatpush.xpose.msra.mxu0 0.0
        %305 = vmatpush.xpose.msra.mxu0 0.0
        %306 = vmatpush.xpose.msra.mxu0 0.0
        %307 = vmatpush.xpose.msra.mxu0 0.0
        %308 = vmatpush.xpose.msra.mxu0 0.0
        %309 = vmatpush.xpose.msra.mxu0 0.0
        %310 = vmatpush.xpose.msra.mxu0 0.0
        %311 = vmatpush.xpose.msra.mxu0 %v272
        %312 = vmatpush.xpose.msra.mxu0 %v269
        %313 = vmatmul.f32.gmra.mxu0 %v295
        %v314 = vpop.f32.mrf.mxu0
        %v315 = vadd.f32 0.0, %v314
        %316 = vdwg.mxu0
        %v318 = vsel %vm264, %v258, 0
        %320 = vmatpush.xpose.msra.mxu0 0.0
        %321 = vmatpush.xpose.msra.mxu0 0.0
        %322 = vmatpush.xpose.msra.mxu0 0.0
        %323 = vmatpush.xpose.msra.mxu0 0.0
        %324 = vmatpush.xpose.msra.mxu0 0.0
        %325 = vmatpush.xpose.msra.mxu0 0.0
        %326 = vmatpush.xpose.msra.mxu0 0.0
        %327 = vmatpush.xpose.msra.mxu0 0.0
        %328 = vmatpush.xpose.msra.mxu0 0.0
        %329 = vmatpush.xpose.msra.mxu0 0.0
        %330 = vmatpush.xpose.msra.mxu0 0.0
        %331 = vmatpush.xpose.msra.mxu0 0.0
        %332 = vmatpush.xpose.msra.mxu0 0.0
        %333 = vmatpush.xpose.msra.mxu0 0.0
        %334 = vmatpush.xpose.msra.mxu0 %v272
        %335 = vmatpush.xpose.msra.mxu0 %v269
        %336 = vmatmul.f32.gmra.mxu0 %v318
        %v337 = vpop.f32.mrf.mxu0
        %v338 = vadd.f32 0.0, %v337
        %339 = vdwg.mxu0
        %v341 = vsel %vm264, %v259, 0
        %343 = vmatpush.xpose.msra.mxu0 0.0
        %344 = vmatpush.xpose.msra.mxu0 0.0
        %345 = vmatpush.xpose.msra.mxu0 0.0
        %346 = vmatpush.xpose.msra.mxu0 0.0
        %347 = vmatpush.xpose.msra.mxu0 0.0
        %348 = vmatpush.xpose.msra.mxu0 0.0
        %349 = vmatpush.xpose.msra.mxu0 0.0
        %350 = vmatpush.xpose.msra.mxu0 0.0
        %351 = vmatpush.xpose.msra.mxu0 0.0
        %352 = vmatpush.xpose.msra.mxu0 0.0
        %353 = vmatpush.xpose.msra.mxu0 0.0
        %354 = vmatpush.xpose.msra.mxu0 0.0
        %355 = vmatpush.xpose.msra.mxu0 0.0
        %356 = vmatpush.xpose.msra.mxu0 0.0
        %357 = vmatpush.xpose.msra.mxu0 %v272
        %358 = vmatpush.xpose.msra.mxu0 %v269
        %359 = vmatmul.f32.gmra.mxu0 %v341
        %v360 = vpop.f32.mrf.mxu0
        %v361 = vadd.f32 0.0, %v360
        %362 = vdwg.mxu0
        %v364 = vsel %vm264, %v262, 0
        %v367 = vsel %vm264, %v263, 0
        %369 = vmatpush.xpose.msra.mxu0 0.0
        %370 = vmatpush.xpose.msra.mxu0 0.0
        %371 = vmatpush.xpose.msra.mxu0 0.0
        %372 = vmatpush.xpose.msra.mxu0 0.0
        %373 = vmatpush.xpose.msra.mxu0 0.0
        %374 = vmatpush.xpose.msra.mxu0 0.0
        %375 = vmatpush.xpose.msra.mxu0 0.0
        %376 = vmatpush.xpose.msra.mxu0 0.0
        %377 = vmatpush.xpose.msra.mxu0 0.0
        %378 = vmatpush.xpose.msra.mxu0 0.0
        %379 = vmatpush.xpose.msra.mxu0 0.0
        %380 = vmatpush.xpose.msra.mxu0 0.0
        %381 = vmatpush.xpose.msra.mxu0 0.0
        %382 = vmatpush.xpose.msra.mxu0 0.0
        %383 = vmatpush.xpose.msra.mxu0 %v367
        %384 = vmatpush.xpose.msra.mxu0 %v364
        %385 = vmatmul.f32.gmra.mxu0 %v266
        %v386 = vpop.f32.mrf.mxu0
        %v387 = vadd.f32 0.0, %v386
        %388 = vdwg.mxu0
        %389 = vmatpush.xpose.msra.mxu0 0.0
        %390 = vmatpush.xpose.msra.mxu0 0.0
        %391 = vmatpush.xpose.msra.mxu0 0.0
        %392 = vmatpush.xpose.msra.mxu0 0.0
        %393 = vmatpush.xpose.msra.mxu0 0.0
        %394 = vmatpush.xpose.msra.mxu0 0.0
        %395 = vmatpush.xpose.msra.mxu0 0.0
        %396 = vmatpush.xpose.msra.mxu0 0.0
        %397 = vmatpush.xpose.msra.mxu0 0.0
        %398 = vmatpush.xpose.msra.mxu0 0.0
        %399 = vmatpush.xpose.msra.mxu0 0.0
        %400 = vmatpush.xpose.msra.mxu0 0.0
        %401 = vmatpush.xpose.msra.mxu0 0.0
        %402 = vmatpush.xpose.msra.mxu0 0.0
        %403 = vmatpush.xpose.msra.mxu0 %v367
        %404 = vmatpush.xpose.msra.mxu0 %v364
        %405 = vmatmul.f32.gmra.mxu0 %v295
        %v406 = vpop.f32.mrf.mxu0
        %v407 = vadd.f32 0.0, %v406
        %408 = vdwg.mxu0
        %409 = vmatpush.xpose.msra.mxu0 0.0
        %410 = vmatpush.xpose.msra.mxu0 0.0
        %411 = vmatpush.xpose.msra.mxu0 0.0
        %412 = vmatpush.xpose.msra.mxu0 0.0
        %413 = vmatpush.xpose.msra.mxu0 0.0
        %414 = vmatpush.xpose.msra.mxu0 0.0
        %415 = vmatpush.xpose.msra.mxu0 0.0
        %416 = vmatpush.xpose.msra.mxu0 0.0
        %417 = vmatpush.xpose.msra.mxu0 0.0
        %418 = vmatpush.xpose.msra.mxu0 0.0
        %419 = vmatpush.xpose.msra.mxu0 0.0
        %420 = vmatpush.xpose.msra.mxu0 0.0
        %421 = vmatpush.xpose.msra.mxu0 0.0
        %422 = vmatpush.xpose.msra.mxu0 0.0
        %423 = vmatpush.xpose.msra.mxu0 %v367
        %424 = vmatpush.xpose.msra.mxu0 %v364
        %425 = vmatmul.f32.gmra.mxu0 %v318
        %v426 = vpop.f32.mrf.mxu0
        %v427 = vadd.f32 0.0, %v426
        %428 = vdwg.mxu0
        %429 = vmatpush.xpose.msra.mxu0 0.0
        %430 = vmatpush.xpose.msra.mxu0 0.0
        %431 = vmatpush.xpose.msra.mxu0 0.0
        %432 = vmatpush.xpose.msra.mxu0 0.0
        %433 = vmatpush.xpose.msra.mxu0 0.0
        %434 = vmatpush.xpose.msra.mxu0 0.0
        %435 = vmatpush.xpose.msra.mxu0 0.0
        %436 = vmatpush.xpose.msra.mxu0 0.0
        %437 = vmatpush.xpose.msra.mxu0 0.0
        %438 = vmatpush.xpose.msra.mxu0 0.0
        %439 = vmatpush.xpose.msra.mxu0 0.0
        %440 = vmatpush.xpose.msra.mxu0 0.0
        %441 = vmatpush.xpose.msra.mxu0 0.0
        %442 = vmatpush.xpose.msra.mxu0 0.0
        %443 = vmatpush.xpose.msra.mxu0 %v367
        %444 = vmatpush.xpose.msra.mxu0 %v364
        %445 = vmatmul.f32.gmra.mxu0 %v341
        %v446 = vpop.f32.mrf.mxu0
        %v447 = vadd.f32 0.0, %v446
        %448 = vdwg.mxu0
        %v449 = vmax.f32 %v292, %v387
        %v450 = vmax.f32 %v315, %v407
        %v451 = vmax.f32 %v338, %v427
        %v452 = vmax.f32 %v361, %v447
        %vm453 = vcmask 65536
        %454 = vst.msk [vmem:[%s254] sm:$0x1] %vm453, %v449
        %455 = vst.msk [vmem:[%s254 + $0x10] sm:$0x1] %vm453, %v450
        %456 = vst.msk [vmem:[%s254 + $0x20] sm:$0x1] %vm453, %v451
        %457 = vst.msk [vmem:[%s254 + $0x30] sm:$0x1] %vm453, %v452
        %v458 = vrot.slane %v256, 1
        %v459 = vrot.slane %v257, 1
        %v460 = vrot.slane %v258, 1
        %v461 = vrot.slane %v259, 1
        %462 = vrot.lane.b32.xlu0 %v458, 16
        %v463 = vpop.permute.xlu0 %462
        %464 = vrot.lane.b32.xlu0 %v459, 16
        %v465 = vpop.permute.xlu0 %464
        %466 = vrot.lane.b32.xlu0 %v460, 16
        %v467 = vpop.permute.xlu0 %466
        %468 = vrot.lane.b32.xlu0 %v461, 16
        %v469 = vpop.permute.xlu0 %468
        %v474 = vmax.f32 %v256, %v463
        %v475 = vmax.f32 %v257, %v465
        %v476 = vmax.f32 %v258, %v467
        %v477 = vmax.f32 %v259, %v469
        %479 = vrot.lane.b32.xlu0 %v474, 112
        %v480 = vpop.permute.xlu0 %479
        %v481 = vsel %vm264, %v480, 0
        %483 = vmatpush.xpose.msra.mxu0 0.0
        %484 = vmatpush.xpose.msra.mxu0 0.0
        %485 = vmatpush.xpose.msra.mxu0 0.0
        %486 = vmatpush.xpose.msra.mxu0 0.0
        %487 = vmatpush.xpose.msra.mxu0 0.0
        %488 = vmatpush.xpose.msra.mxu0 0.0
        %489 = vmatpush.xpose.msra.mxu0 0.0
        %490 = vmatpush.xpose.msra.mxu0 0.0
        %491 = vmatpush.xpose.msra.mxu0 0.0
        %492 = vmatpush.xpose.msra.mxu0 0.0
        %493 = vmatpush.xpose.msra.mxu0 0.0
        %494 = vmatpush.xpose.msra.mxu0 0.0
        %495 = vmatpush.xpose.msra.mxu0 0.0
        %496 = vmatpush.xpose.msra.mxu0 0.0
        %497 = vmatpush.xpose.msra.mxu0 %v272
        %498 = vmatpush.xpose.msra.mxu0 %v269
        %499 = vmatmul.f32.gmra.mxu0 %v481
        %v500 = vpop.f32.mrf.mxu0
        %v501 = vadd.f32 0.0, %v500
        %502 = vdwg.mxu0
        %504 = vrot.lane.b32.xlu0 %v475, 112
        %v505 = vpop.permute.xlu0 %504
        %v506 = vsel %vm264, %v505, 0
        %508 = vmatpush.xpose.msra.mxu0 0.0
        %509 = vmatpush.xpose.msra.mxu0 0.0
        %510 = vmatpush.xpose.msra.mxu0 0.0
        %511 = vmatpush.xpose.msra.mxu0 0.0
        %512 = vmatpush.xpose.msra.mxu0 0.0
        %513 = vmatpush.xpose.msra.mxu0 0.0
        %514 = vmatpush.xpose.msra.mxu0 0.0
        %515 = vmatpush.xpose.msra.mxu0 0.0
        %516 = vmatpush.xpose.msra.mxu0 0.0
        %517 = vmatpush.xpose.msra.mxu0 0.0
        %518 = vmatpush.xpose.msra.mxu0 0.0
        %519 = vmatpush.xpose.msra.mxu0 0.0
        %520 = vmatpush.xpose.msra.mxu0 0.0
        %521 = vmatpush.xpose.msra.mxu0 0.0
        %522 = vmatpush.xpose.msra.mxu0 %v272
        %523 = vmatpush.xpose.msra.mxu0 %v269
        %524 = vmatmul.f32.gmra.mxu0 %v506
        %v525 = vpop.f32.mrf.mxu0
        %v526 = vadd.f32 0.0, %v525
        %527 = vdwg.mxu0
        %529 = vrot.lane.b32.xlu0 %v476, 112
        %v530 = vpop.permute.xlu0 %529
        %v531 = vsel %vm264, %v530, 0
        %533 = vmatpush.xpose.msra.mxu0 0.0
        %534 = vmatpush.xpose.msra.mxu0 0.0
        %535 = vmatpush.xpose.msra.mxu0 0.0
        %536 = vmatpush.xpose.msra.mxu0 0.0
        %537 = vmatpush.xpose.msra.mxu0 0.0
        %538 = vmatpush.xpose.msra.mxu0 0.0
        %539 = vmatpush.xpose.msra.mxu0 0.0
        %540 = vmatpush.xpose.msra.mxu0 0.0
        %541 = vmatpush.xpose.msra.mxu0 0.0
        %542 = vmatpush.xpose.msra.mxu0 0.0
        %543 = vmatpush.xpose.msra.mxu0 0.0
        %544 = vmatpush.xpose.msra.mxu0 0.0
        %545 = vmatpush.xpose.msra.mxu0 0.0
        %546 = vmatpush.xpose.msra.mxu0 0.0
        %547 = vmatpush.xpose.msra.mxu0 %v272
        %548 = vmatpush.xpose.msra.mxu0 %v269
        %549 = vmatmul.f32.gmra.mxu0 %v531
        %v550 = vpop.f32.mrf.mxu0
        %v551 = vadd.f32 0.0, %v550
        %552 = vdwg.mxu0
        %554 = vrot.lane.b32.xlu0 %v477, 112
        %v555 = vpop.permute.xlu0 %554
        %v556 = vsel %vm264, %v555, 0
        %558 = vmatpush.xpose.msra.mxu0 0.0
        %559 = vmatpush.xpose.msra.mxu0 0.0
        %560 = vmatpush.xpose.msra.mxu0 0.0
        %561 = vmatpush.xpose.msra.mxu0 0.0
        %562 = vmatpush.xpose.msra.mxu0 0.0
        %563 = vmatpush.xpose.msra.mxu0 0.0
        %564 = vmatpush.xpose.msra.mxu0 0.0
        %565 = vmatpush.xpose.msra.mxu0 0.0
        %566 = vmatpush.xpose.msra.mxu0 0.0
        %567 = vmatpush.xpose.msra.mxu0 0.0
        %568 = vmatpush.xpose.msra.mxu0 0.0
        %569 = vmatpush.xpose.msra.mxu0 0.0
        %570 = vmatpush.xpose.msra.mxu0 0.0
        %571 = vmatpush.xpose.msra.mxu0 0.0
        %572 = vmatpush.xpose.msra.mxu0 %v272
        %573 = vmatpush.xpose.msra.mxu0 %v269
        %574 = vmatmul.f32.gmra.mxu0 %v556
        %v575 = vpop.f32.mrf.mxu0
        %v576 = vadd.f32 0.0, %v575
        %577 = vdwg.mxu0
        %578 = vmatpush.xpose.msra.mxu0 0.0
        %579 = vmatpush.xpose.msra.mxu0 0.0
        %580 = vmatpush.xpose.msra.mxu0 0.0
        %581 = vmatpush.xpose.msra.mxu0 0.0
        %582 = vmatpush.xpose.msra.mxu0 0.0
        %583 = vmatpush.xpose.msra.mxu0 0.0
        %584 = vmatpush.xpose.msra.mxu0 0.0
        %585 = vmatpush.xpose.msra.mxu0 0.0
        %586 = vmatpush.xpose.msra.mxu0 0.0
        %587 = vmatpush.xpose.msra.mxu0 0.0
        %588 = vmatpush.xpose.msra.mxu0 0.0
        %589 = vmatpush.xpose.msra.mxu0 0.0
        %590 = vmatpush.xpose.msra.mxu0 0.0
        %591 = vmatpush.xpose.msra.mxu0 0.0
        %592 = vmatpush.xpose.msra.mxu0 %v367
        %593 = vmatpush.xpose.msra.mxu0 %v364
        %594 = vmatmul.f32.gmra.mxu0 %v481
        %v595 = vpop.f32.mrf.mxu0
        %v596 = vadd.f32 0.0, %v595
        %597 = vdwg.mxu0
        %598 = vmatpush.xpose.msra.mxu0 0.0
        %599 = vmatpush.xpose.msra.mxu0 0.0
        %600 = vmatpush.xpose.msra.mxu0 0.0
        %601 = vmatpush.xpose.msra.mxu0 0.0
        %602 = vmatpush.xpose.msra.mxu0 0.0
        %603 = vmatpush.xpose.msra.mxu0 0.0
        %604 = vmatpush.xpose.msra.mxu0 0.0
        %605 = vmatpush.xpose.msra.mxu0 0.0
        %606 = vmatpush.xpose.msra.mxu0 0.0
        %607 = vmatpush.xpose.msra.mxu0 0.0
        %608 = vmatpush.xpose.msra.mxu0 0.0
        %609 = vmatpush.xpose.msra.mxu0 0.0
        %610 = vmatpush.xpose.msra.mxu0 0.0
        %611 = vmatpush.xpose.msra.mxu0 0.0
        %612 = vmatpush.xpose.msra.mxu0 %v367
        %613 = vmatpush.xpose.msra.mxu0 %v364
        %614 = vmatmul.f32.gmra.mxu0 %v506
        %v615 = vpop.f32.mrf.mxu0
        %v616 = vadd.f32 0.0, %v615
        %617 = vdwg.mxu0
        %618 = vmatpush.xpose.msra.mxu0 0.0
        %619 = vmatpush.xpose.msra.mxu0 0.0
        %620 = vmatpush.xpose.msra.mxu0 0.0
        %621 = vmatpush.xpose.msra.mxu0 0.0
        %622 = vmatpush.xpose.msra.mxu0 0.0
        %623 = vmatpush.xpose.msra.mxu0 0.0
        %624 = vmatpush.xpose.msra.mxu0 0.0
        %625 = vmatpush.xpose.msra.mxu0 0.0
        %626 = vmatpush.xpose.msra.mxu0 0.0
        %627 = vmatpush.xpose.msra.mxu0 0.0
        %628 = vmatpush.xpose.msra.mxu0 0.0
        %629 = vmatpush.xpose.msra.mxu0 0.0
        %630 = vmatpush.xpose.msra.mxu0 0.0
        %631 = vmatpush.xpose.msra.mxu0 0.0
        %632 = vmatpush.xpose.msra.mxu0 %v367
        %633 = vmatpush.xpose.msra.mxu0 %v364
        %634 = vmatmul.f32.gmra.mxu0 %v531
        %v635 = vpop.f32.mrf.mxu0
        %v636 = vadd.f32 0.0, %v635
        %637 = vdwg.mxu0
        %638 = vmatpush.xpose.msra.mxu0 0.0
        %639 = vmatpush.xpose.msra.mxu0 0.0
        %640 = vmatpush.xpose.msra.mxu0 0.0
        %641 = vmatpush.xpose.msra.mxu0 0.0
        %642 = vmatpush.xpose.msra.mxu0 0.0
        %643 = vmatpush.xpose.msra.mxu0 0.0
        %644 = vmatpush.xpose.msra.mxu0 0.0
        %645 = vmatpush.xpose.msra.mxu0 0.0
        %646 = vmatpush.xpose.msra.mxu0 0.0
        %647 = vmatpush.xpose.msra.mxu0 0.0
        %648 = vmatpush.xpose.msra.mxu0 0.0
        %649 = vmatpush.xpose.msra.mxu0 0.0
        %650 = vmatpush.xpose.msra.mxu0 0.0
        %651 = vmatpush.xpose.msra.mxu0 0.0
        %652 = vmatpush.xpose.msra.mxu0 %v367
        %653 = vmatpush.xpose.msra.mxu0 %v364
        %654 = vmatmul.f32.gmra.mxu0 %v556
        %v655 = vpop.f32.mrf.mxu0
        %v656 = vadd.f32 0.0, %v655
        %657 = vdwg.mxu0
        %v658 = vmax.f32 %v501, %v596
        %v659 = vmax.f32 %v526, %v616
        %v660 = vmax.f32 %v551, %v636
        %v661 = vmax.f32 %v576, %v656
        %vm662 = vcmask 71680
        %663 = vst.msk [vmem:[%s254 + $0x1] sm:$0x7f] %vm662, %v658
        %664 = vst.msk [vmem:[%s254 + $0x11] sm:$0x7f] %vm662, %v659
        %665 = vst.msk [vmem:[%s254 + $0x21] sm:$0x7f] %vm662, %v660
        %666 = vst.msk [vmem:[%s254 + $0x31] sm:$0x7f] %vm662, %v661
        %v667 = vrot.slane %v256, 7
        %668 = vrot.lane.b32.xlu0 %v667, 112
        %v669 = vpop.permute.xlu0 %668
        %v670 = vsel %vm264, %v669, 0
        %672 = vmatpush.xpose.msra.mxu0 0.0
        %673 = vmatpush.xpose.msra.mxu0 0.0
        %674 = vmatpush.xpose.msra.mxu0 0.0
        %675 = vmatpush.xpose.msra.mxu0 0.0
        %676 = vmatpush.xpose.msra.mxu0 0.0
        %677 = vmatpush.xpose.msra.mxu0 0.0
        %678 = vmatpush.xpose.msra.mxu0 0.0
        %679 = vmatpush.xpose.msra.mxu0 0.0
        %680 = vmatpush.xpose.msra.mxu0 0.0
        %681 = vmatpush.xpose.msra.mxu0 0.0
        %682 = vmatpush.xpose.msra.mxu0 0.0
        %683 = vmatpush.xpose.msra.mxu0 0.0
        %684 = vmatpush.xpose.msra.mxu0 0.0
        %685 = vmatpush.xpose.msra.mxu0 0.0
        %686 = vmatpush.xpose.msra.mxu0 %v272
        %687 = vmatpush.xpose.msra.mxu0 %v269
        %688 = vmatmul.f32.gmra.mxu0 %v670
        %v689 = vpop.f32.mrf.mxu0
        %v690 = vadd.f32 0.0, %v689
        %691 = vdwg.mxu0
        %v692 = vrot.slane %v257, 7
        %693 = vrot.lane.b32.xlu0 %v692, 112
        %v694 = vpop.permute.xlu0 %693
        %v695 = vsel %vm264, %v694, 0
        %697 = vmatpush.xpose.msra.mxu0 0.0
        %698 = vmatpush.xpose.msra.mxu0 0.0
        %699 = vmatpush.xpose.msra.mxu0 0.0
        %700 = vmatpush.xpose.msra.mxu0 0.0
        %701 = vmatpush.xpose.msra.mxu0 0.0
        %702 = vmatpush.xpose.msra.mxu0 0.0
        %703 = vmatpush.xpose.msra.mxu0 0.0
        %704 = vmatpush.xpose.msra.mxu0 0.0
        %705 = vmatpush.xpose.msra.mxu0 0.0
        %706 = vmatpush.xpose.msra.mxu0 0.0
        %707 = vmatpush.xpose.msra.mxu0 0.0
        %708 = vmatpush.xpose.msra.mxu0 0.0
        %709 = vmatpush.xpose.msra.mxu0 0.0
        %710 = vmatpush.xpose.msra.mxu0 0.0
        %711 = vmatpush.xpose.msra.mxu0 %v272
        %712 = vmatpush.xpose.msra.mxu0 %v269
        %713 = vmatmul.f32.gmra.mxu0 %v695
        %v714 = vpop.f32.mrf.mxu0
        %v715 = vadd.f32 0.0, %v714
        %716 = vdwg.mxu0
        %v717 = vrot.slane %v258, 7
        %718 = vrot.lane.b32.xlu0 %v717, 112
        %v719 = vpop.permute.xlu0 %718
        %v720 = vsel %vm264, %v719, 0
        %722 = vmatpush.xpose.msra.mxu0 0.0
        %723 = vmatpush.xpose.msra.mxu0 0.0
        %724 = vmatpush.xpose.msra.mxu0 0.0
        %725 = vmatpush.xpose.msra.mxu0 0.0
        %726 = vmatpush.xpose.msra.mxu0 0.0
        %727 = vmatpush.xpose.msra.mxu0 0.0
        %728 = vmatpush.xpose.msra.mxu0 0.0
        %729 = vmatpush.xpose.msra.mxu0 0.0
        %730 = vmatpush.xpose.msra.mxu0 0.0
        %731 = vmatpush.xpose.msra.mxu0 0.0
        %732 = vmatpush.xpose.msra.mxu0 0.0
        %733 = vmatpush.xpose.msra.mxu0 0.0
        %734 = vmatpush.xpose.msra.mxu0 0.0
        %735 = vmatpush.xpose.msra.mxu0 0.0
        %736 = vmatpush.xpose.msra.mxu0 %v272
        %737 = vmatpush.xpose.msra.mxu0 %v269
        %738 = vmatmul.f32.gmra.mxu0 %v720
        %v739 = vpop.f32.mrf.mxu0
        %v740 = vadd.f32 0.0, %v739
        %741 = vdwg.mxu0
        %v742 = vrot.slane %v259, 7
        %743 = vrot.lane.b32.xlu0 %v742, 112
        %v744 = vpop.permute.xlu0 %743
        %v745 = vsel %vm264, %v744, 0
        %747 = vmatpush.xpose.msra.mxu0 0.0
        %748 = vmatpush.xpose.msra.mxu0 0.0
        %749 = vmatpush.xpose.msra.mxu0 0.0
        %750 = vmatpush.xpose.msra.mxu0 0.0
        %751 = vmatpush.xpose.msra.mxu0 0.0
        %752 = vmatpush.xpose.msra.mxu0 0.0
        %753 = vmatpush.xpose.msra.mxu0 0.0
        %754 = vmatpush.xpose.msra.mxu0 0.0
        %755 = vmatpush.xpose.msra.mxu0 0.0
        %756 = vmatpush.xpose.msra.mxu0 0.0
        %757 = vmatpush.xpose.msra.mxu0 0.0
        %758 = vmatpush.xpose.msra.mxu0 0.0
        %759 = vmatpush.xpose.msra.mxu0 0.0
        %760 = vmatpush.xpose.msra.mxu0 0.0
        %761 = vmatpush.xpose.msra.mxu0 %v272
        %762 = vmatpush.xpose.msra.mxu0 %v269
        %763 = vmatmul.f32.gmra.mxu0 %v745
        %v764 = vpop.f32.mrf.mxu0
        %v765 = vadd.f32 0.0, %v764
        %766 = vdwg.mxu0
        %767 = vmatpush.xpose.msra.mxu0 0.0
        %768 = vmatpush.xpose.msra.mxu0 0.0
        %769 = vmatpush.xpose.msra.mxu0 0.0
        %770 = vmatpush.xpose.msra.mxu0 0.0
        %771 = vmatpush.xpose.msra.mxu0 0.0
        %772 = vmatpush.xpose.msra.mxu0 0.0
        %773 = vmatpush.xpose.msra.mxu0 0.0
        %774 = vmatpush.xpose.msra.mxu0 0.0
        %775 = vmatpush.xpose.msra.mxu0 0.0
        %776 = vmatpush.xpose.msra.mxu0 0.0
        %777 = vmatpush.xpose.msra.mxu0 0.0
        %778 = vmatpush.xpose.msra.mxu0 0.0
        %779 = vmatpush.xpose.msra.mxu0 0.0
        %780 = vmatpush.xpose.msra.mxu0 0.0
        %781 = vmatpush.xpose.msra.mxu0 %v367
        %782 = vmatpush.xpose.msra.mxu0 %v364
        %783 = vmatmul.f32.gmra.mxu0 %v670
        %v784 = vpop.f32.mrf.mxu0
        %v785 = vadd.f32 0.0, %v784
        %786 = vdwg.mxu0
        %787 = vmatpush.xpose.msra.mxu0 0.0
        %788 = vmatpush.xpose.msra.mxu0 0.0
        %789 = vmatpush.xpose.msra.mxu0 0.0
        %790 = vmatpush.xpose.msra.mxu0 0.0
        %791 = vmatpush.xpose.msra.mxu0 0.0
        %792 = vmatpush.xpose.msra.mxu0 0.0
        %793 = vmatpush.xpose.msra.mxu0 0.0
        %794 = vmatpush.xpose.msra.mxu0 0.0
        %795 = vmatpush.xpose.msra.mxu0 0.0
        %796 = vmatpush.xpose.msra.mxu0 0.0
        %797 = vmatpush.xpose.msra.mxu0 0.0
        %798 = vmatpush.xpose.msra.mxu0 0.0
        %799 = vmatpush.xpose.msra.mxu0 0.0
        %800 = vmatpush.xpose.msra.mxu0 0.0
        %801 = vmatpush.xpose.msra.mxu0 %v367
        %802 = vmatpush.xpose.msra.mxu0 %v364
        %803 = vmatmul.f32.gmra.mxu0 %v695
        %v804 = vpop.f32.mrf.mxu0
        %v805 = vadd.f32 0.0, %v804
        %806 = vdwg.mxu0
        %807 = vmatpush.xpose.msra.mxu0 0.0
        %808 = vmatpush.xpose.msra.mxu0 0.0
        %809 = vmatpush.xpose.msra.mxu0 0.0
        %810 = vmatpush.xpose.msra.mxu0 0.0
        %811 = vmatpush.xpose.msra.mxu0 0.0
        %812 = vmatpush.xpose.msra.mxu0 0.0
        %813 = vmatpush.xpose.msra.mxu0 0.0
        %814 = vmatpush.xpose.msra.mxu0 0.0
        %815 = vmatpush.xpose.msra.mxu0 0.0
        %816 = vmatpush.xpose.msra.mxu0 0.0
        %817 = vmatpush.xpose.msra.mxu0 0.0
        %818 = vmatpush.xpose.msra.mxu0 0.0
        %819 = vmatpush.xpose.msra.mxu0 0.0
        %820 = vmatpush.xpose.msra.mxu0 0.0
        %821 = vmatpush.xpose.msra.mxu0 %v367
        %822 = vmatpush.xpose.msra.mxu0 %v364
        %823 = vmatmul.f32.gmra.mxu0 %v720
        %v824 = vpop.f32.mrf.mxu0
        %v825 = vadd.f32 0.0, %v824
        %826 = vdwg.mxu0
        %827 = vmatpush.xpose.msra.mxu0 0.0
        %828 = vmatpush.xpose.msra.mxu0 0.0
        %829 = vmatpush.xpose.msra.mxu0 0.0
        %830 = vmatpush.xpose.msra.mxu0 0.0
        %831 = vmatpush.xpose.msra.mxu0 0.0
        %832 = vmatpush.xpose.msra.mxu0 0.0
        %833 = vmatpush.xpose.msra.mxu0 0.0
        %834 = vmatpush.xpose.msra.mxu0 0.0
        %835 = vmatpush.xpose.msra.mxu0 0.0
        %836 = vmatpush.xpose.msra.mxu0 0.0
        %837 = vmatpush.xpose.msra.mxu0 0.0
        %838 = vmatpush.xpose.msra.mxu0 0.0
        %839 = vmatpush.xpose.msra.mxu0 0.0
        %840 = vmatpush.xpose.msra.mxu0 0.0
        %841 = vmatpush.xpose.msra.mxu0 %v367
        %842 = vmatpush.xpose.msra.mxu0 %v364
        %843 = vmatmul.f32.gmra.mxu0 %v745
        %v844 = vpop.f32.mrf.mxu0
        %v845 = vadd.f32 0.0, %v844
        %846 = vdwg.mxu0
        %v847 = vmax.f32 %v690, %v785
        %v848 = vmax.f32 %v715, %v805
        %v849 = vmax.f32 %v740, %v825
        %v850 = vmax.f32 %v765, %v845
        %851 = vst.msk [vmem:[%s254 + $0x8] sm:$0x1] %vm453, %v847
        %852 = vst.msk [vmem:[%s254 + $0x18] sm:$0x1] %vm453, %v848
        %853 = vst.msk [vmem:[%s254 + $0x28] sm:$0x1] %vm453, %v849
        %854 = vst.msk [vmem:[%s254 + $0x38] sm:$0x1] %vm453, %v850
        %s855 = smul.u32 4, %s23
        %p856 = scmp.lt.s32.totalorder %s22, 1
        %s857 = scalar_select %p856, %s22, 1
        %p858 = scmp.lt.s32.totalorder %s855, 3
        %s859 = scalar_select %p858, %s855, 3
        %s860 = smul.addr %s859, 2
        %s861 = smul.addr %s857, 8
        %s862 = sadd.s32 %s860, %s861
        %s863 = smul.addr %s862, 8
        %s864 = scalar_lea.vmem %s3, %s863
        // Predicated region
        $region45: #{tpu_custom_call.1} parent=31 // pred_check
          %p865 = pneg %p120
        $region46: #{tpu_custom_call.1} parent=31 // pred_check_branch
          %867 = sbr.rel (%p865) target = $region48
        $region47: #{tpu_custom_call.1} parent=31 // pred_region
          %s868 = smul.u32 4, %s23
        $region48: #{tpu_custom_call.1} parent=31 // pred_fallthru
          _
      $region32: #{tpu_custom_call.1} parent=5 // pred_fallthru
        _
      %p869 = scmp.le.s32.totalorder 2, %s13
      // Predicated region
      $region49: #{tpu_custom_call.1} parent=5 // pred_check
        %p870 = pneg %p869
      $region50: #{tpu_custom_call.1} parent=5 // pred_check_branch
        %872 = sbr.rel (%p870) target = $region52
      $region51: #{tpu_custom_call.1} parent=5 // pred_region
        %s873 = ssub.s32 %s13, 2
        // Predicated region
        $region53: #{tpu_custom_call.1} parent=51 // pred_check
          %p874 = pneg %p126
        $region54: #{tpu_custom_call.1} parent=51 // pred_check_branch
          %876 = sbr.rel (%p874) target = $region56
        $region55: #{tpu_custom_call.1} parent=51 // pred_region
          %s877 = smul.u32 4, %s25
          %p878 = scmp.lt.s32.totalorder %s24, 1
          %s879 = scalar_select %p878, %s24, 1
          %p880 = scmp.lt.s32.totalorder %s877, 3
          %s881 = scalar_select %p880, %s877, 3
          %s882 = smul.addr %s881, 2
          %s883 = smul.addr %s879, 8
          %s884 = sadd.s32 %s882, %s883
          %s885 = smul.addr %s884, 8
          %s886 = scalar_lea.vmem %s3, %s885
        $region56: #{tpu_custom_call.1} parent=51 // pred_fallthru
          _
      $region52: #{tpu_custom_call.1} parent=5 // pred_fallthru
        _
    $region6: #{tpu_custom_call.1} parent=1 // loop_footer
      %s17 = sadd.s32 1, %s13
    $region7: #{tpu_custom_call.1} parent=1 // loop_footer_branch
      %12 = sbr.rel target = $region3
    $region8: #{tpu_custom_call.1} parent=1 // loop_exit
      _
    %887 = vsyncpa [#allocation3], 1
    %s888 = scalar_lea.sflag [#allocation3], 1
    %889 = vsyncpa %s888, 1
    %890 = vsyncpa [#allocation5], 1

</llo_original>
